<compile_context>
chip_gen: v7x
topology: tpu7x:2x2x1
jax: 0.10.0
libtpu: 0.0.40
codegen_flags: <defaults>
</compile_context>

<pallas_src>
import functools

import jax
import jax.numpy as jnp
from jax.experimental import pallas as pl
from jax.experimental.pallas import tpu as pltpu


_VMEM_LIMIT_BYTES = 48 * 1024 * 1024   # <= v7x physical (64 MiB), > default scoped limits
_VMEM_BLOCK_BUDGET = 40 * 1024 * 1024  # target for double-buffered blocks + weights
_MAX_UNROLL = 16                       # cap on statically unrolled batch elements / step


def _gconv_kernel(J, wr_ref, x_ref, fcw_ref, fcb_ref, perm_ref, out_ref):
    # wr_ref:   (Bb, N, N*J)    interleaved columns: wr[b, i, k*J + j] = W[b, i, k, j]
    # x_ref:    (Bb, N, F_in)   f32
    # fcw_ref:  (F_in, J*F_out) f32, fcw[c, j*F_out + f] = fc_weight[f, j*F_in + c]
    # fcb_ref:  (1, F_out)      f32
    # perm_ref: (N*J, N*J)      0/1 row permutation: block order (j*N+k) -> (k*J+j)
    # out_ref:  (Bb, N, F_out)
    Bb, N, F_in = x_ref.shape
    F_out = out_ref.shape[-1]
    NJ = N * J
    cdt = wr_ref.dtype                                   # MXU input dtype (bf16 default)

    # One batched MXU push for the fc product across all Bb batch elements and
    # all J operators (avoids Bb*J tiny (N,F_in)@(F_in,F_out) dots).
    if Bb > 1:
        x_all = jnp.concatenate([x_ref[b] for b in range(Bb)], axis=0)   # (Bb*N, F_in)
    else:
        x_all = x_ref[0]
    z_all = jnp.dot(x_all, fcw_ref[...],
                    preferred_element_type=jnp.float32)                  # (Bb*N, J*F_out)

    perm = perm_ref[...]                                 # reused across the unrolled loop
    fcb = jnp.broadcast_to(fcb_ref[...], (N, F_out))     # bias broadcast hoisted once

    for b in range(Bb):                                  # Bb static -> unrolled
        zb = z_all[b * N:(b + 1) * N, :]                 # (N, J*F_out)
        # Block row order (j*N + k): static lane slices + one small sublane concat.
        zb_blk = jnp.concatenate(
            [zb[:, j * F_out:(j + 1) * F_out] for j in range(J)], axis=0
        ).astype(cdt)                                    # (N*J, F_out)
        # Interleave rows to k*J + j (matching wr's free-reshape column order)
        # with a constant 0/1 permutation matmul — a reshape-free relayout the
        # MXU absorbs under the (dominant) W DMA.
        zb_int = jnp.dot(perm, zb_blk,
                         preferred_element_type=jnp.float32).astype(cdt)  # (N*J, F_out)
        acc = jnp.dot(wr_ref[b], zb_int,
                      preferred_element_type=jnp.float32)                 # f32 accumulate
        out_ref[b] = (acc + fcb).astype(out_ref.dtype)


def gconv_forward(W, x, fc_weight, fc_bias, J, *,
                  batch_block=None, compute_dtype=jnp.bfloat16):
    """Pallas implementation of Gconv.forward (bn_bool=False).

    Args:
      W:         (B, N, N, J) float32
      x:         (B, N, F_in) float32
      fc_weight: (F_out, J*F_in) float32  (PyTorch nn.Linear layout)
      fc_bias:   (F_out,) float32
      J:         number of graph operators (static)
      batch_block: batch elements per grid step (None -> auto, VMEM-aware)
      compute_dtype: MXU input dtype for W / Z (bf16 default, f32 for exactness)
    Returns:
      (W, out) with out of shape (B, N, F_out).
    """
    B, N, N2, Jw = W.shape
    assert Jw == J and N2 == N
    F_in = x.shape[-1]
    F_out = fc_weight.shape[0]
    assert fc_weight.shape[1] == J * F_in
    NJ = N * J

    # ---- wrapper-side layout plumbing (reshape-only / tiny tensors) --------
    # Interleaved columns: Wr[b, i, k*J + j] = W[b, i, k, j]  (contiguous reshape,
    # no extra HBM pass).  The cast to the MXU input dtype halves the kernel's
    # HBM reads of W; a no-op if W is already produced upstream in that dtype.
    Wr = W.reshape(B, N, NJ).astype(compute_dtype)
    x_in = x.astype(jnp.float32)
    # fcw_wide[c, j*F_out + f] = fc_weight[f, j*F_in + c]  (tiny tensor)
    fcw_wide = jnp.transpose(fc_weight.reshape(F_out, J, F_in),
                             (2, 1, 0)).reshape(F_in, J * F_out).astype(jnp.float32)
    fcb = fc_bias.reshape(1, F_out).astype(jnp.float32)
    # 0/1 permutation taking block row order (j*N + k) to interleaved (k*J + j).
    r = jnp.arange(NJ)
    src = (r % J) * N + (r // J)
    perm = (jnp.arange(NJ)[None, :] == src[:, None]).astype(compute_dtype)

    # ---- batch blocking: amortize ~0.35us/grid-step, stay inside VMEM ------
    w_isz = jnp.dtype(compute_dtype).itemsize
    o_isz = jnp.dtype(x_in.dtype).itemsize
    w_bytes_per_b = w_isz * N * NJ
    if batch_block is None:
        bb = max(1, (2 * 1024 * 1024) // max(1, w_bytes_per_b))   # ~2 MiB of W per step
        if B * w_bytes_per_b <= 4 * 1024 * 1024:                  # tiny problem: one step
            bb = B
        bb = min(bb, B, _MAX_UNROLL)
        # VMEM clamp: double-buffered blocked operands + grid-invariant operands.
        inv_bytes = 2 * (4 * F_in * J * F_out + 4 * F_out + w_isz * NJ * NJ)
        per_b = 2 * (w_isz * N * NJ + 4 * N * F_in + o_isz * N * F_out)
        while bb > 1 and inv_bytes + bb * per_b > _VMEM_BLOCK_BUDGET:
            bb -= 1
        batch_block = bb
    Bb = max(1, min(int(batch_block), B))
    while B % Bb:                      # keep the tiling exact for odd/prime B
        Bb -= 1
    grid = (B // Bb,)

    # ---- advisory cost estimate --------------------------------------------
    flops = 2 * B * (N * F_in * J * F_out        # x @ fcw_wide
                     + NJ * NJ * F_out           # permutation relayout
                     + N * NJ * F_out)           # Wr @ Z
    bytes_accessed = (w_isz * B * N * NJ + 4 * B * N * F_in + o_isz * B * N * F_out
                      + 4 * (F_in * J * F_out + F_out) + w_isz * NJ * NJ)
    cost = pl.CostEstimate(flops=flops, transcendentals=0,
                           bytes_accessed=bytes_accessed)

    out = pl.pallas_call(
        functools.partial(_gconv_kernel, J),
        out_shape=jax.ShapeDtypeStruct((B, N, F_out), x_in.dtype),
        grid_spec=pltpu.PrefetchScalarGridSpec(
            num_scalar_prefetch=0,
            grid=grid,
            in_specs=[
                pl.BlockSpec((Bb, N, NJ), lambda b: (b, 0, 0)),
                pl.BlockSpec((Bb, N, F_in), lambda b: (b, 0, 0)),
                pl.BlockSpec((F_in, J * F_out), lambda b: (0, 0)),
                pl.BlockSpec((1, F_out), lambda b: (0, 0)),
                pl.BlockSpec((NJ, NJ), lambda b: (0, 0)),
            ],
            out_specs=pl.BlockSpec((Bb, N, F_out), lambda b: (b, 0, 0)),
        ),
        compiler_params=pltpu.CompilerParams(
            dimension_semantics=("parallel",),
            vmem_limit_bytes=_VMEM_LIMIT_BYTES,
        ),
        cost_estimate=cost,
    )(Wr, x_in, fcw_wide, fcb, perm)
    # TODO(synk): bn_bool=True (BatchNorm1d) branch of Gconv is not implemented;
    # the module default is bn_bool=False, which this kernel reproduces.
    return W, out


def gconv_reference(W, x, fc_weight, fc_bias, J):
    """Pure-JAX reference mirroring the PyTorch gmul + fc exactly."""
    B, N, _, _ = W.shape
    Wc = jnp.concatenate([W[..., j] for j in range(J)], axis=1)    # (B, J*N, N)
    y = jnp.einsum("bmn,bnf->bmf", Wc, x)                          # (B, J*N, F_in)
    y = jnp.concatenate([y[:, j * N:(j + 1) * N, :] for j in range(J)],
                        axis=2)                                    # (B, N, J*F_in)
    flat = y.reshape(-1, y.shape[-1])
    out = flat @ fc_weight.T + fc_bias
    return out.reshape(B, N, -1)


if __name__ == "__main__":
    # Small shapes consistent with the module: batch=2, N=16 nodes,
    # nf_input=8, nf_output=32, J=2 graph operators.
    B, N, F_in, F_out, J = 2, 16, 8, 32, 2

    key = jax.random.PRNGKey(0)
    k_w, k_x, k_fcw, k_fcb = jax.random.split(key, 4)

    W = jax.random.normal(k_w, (B, N, N, J), dtype=jnp.float32)
    x = jax.random.normal(k_x, (B, N, F_in), dtype=jnp.float32)
    fc_weight = jax.random.normal(k_fcw, (F_out, J * F_in), dtype=jnp.float32) * 0.1
    fc_bias = jax.random.normal(k_fcb, (F_out,), dtype=jnp.float32) * 0.1

    y_ref = gconv_reference(W, x, fc_weight, fc_bias, J)

    # f32 MXU-input path: tight check against the reference.
    W_out32, y32 = gconv_forward(W, x, fc_weight, fc_bias, J,
                                 compute_dtype=jnp.float32)
    y32 = jax.block_until_ready(y32)
    assert jnp.allclose(y32, y_ref, atol=1e-4, rtol=1e-4), "f32 path mismatch"

    # Default perf path: bf16 MXU inputs for W / Z, f32 accumulation.
    W_out, y = gconv_forward(W, x, fc_weight, fc_bias, J)
    y = jax.block_until_ready(y)
    assert jnp.allclose(y, y_ref, atol=5e-2, rtol=5e-2), "bf16 path mismatch"

    assert W_out.shape == W.shape and y.shape == (B, N, F_out)
    print("KERNEL_OK")
</pallas_src>

<mosaic_0001>
module attributes {stable_mosaic.version = 11 : i64} {
  func.func @_gconv_kernel(%arg0: i32, %arg1: memref<2x16x32xf32, #tpu.memory_space<vmem>>, %arg2: memref<2x16x8xf32, #tpu.memory_space<vmem>>, %arg3: memref<8x64xf32, #tpu.memory_space<vmem>>, %arg4: memref<1x32xf32, #tpu.memory_space<vmem>>, %arg5: memref<32x32xf32, #tpu.memory_space<vmem>>, %arg6: memref<2x16x32xf32, #tpu.memory_space<vmem>>) attributes {dimension_semantics = [#tpu.dimension_semantics<parallel>], iteration_bounds = array<i64: 1>, scalar_prefetch = 0 : i64, scratch_operands = 0 : i64, tpu.core_type = #tpu.core_type<tc>, window_params = [{transform_indices = @transform_0, window_bounds = array<i64: 2, 16, 32>}, {transform_indices = @transform_1, window_bounds = array<i64: 2, 16, 8>}, {pipeline_mode = #tpu.pipeline_mode<synchronous>, transform_indices = @transform_2, window_bounds = array<i64: 8, 64>}, {pipeline_mode = #tpu.pipeline_mode<synchronous>, transform_indices = @transform_3, window_bounds = array<i64: 1, 32>}, {pipeline_mode = #tpu.pipeline_mode<synchronous>, transform_indices = @transform_4, window_bounds = array<i64: 32, 32>}, {transform_indices = @transform_5, window_bounds = array<i64: 2, 16, 32>}]} {
    %c0 = arith.constant 0 : index
    %c0_0 = arith.constant 0 : index
    %c0_1 = arith.constant 0 : index
    %0 = vector.load %arg2[%c0, %c0_0, %c0_1] : memref<2x16x8xf32, #tpu.memory_space<vmem>>, vector<1x16x8xf32>
    %1 = vector.shape_cast %0 : vector<1x16x8xf32> to vector<16x8xf32>
    %c1 = arith.constant 1 : index
    %c0_2 = arith.constant 0 : index
    %c0_3 = arith.constant 0 : index
    %2 = vector.load %arg2[%c1, %c0_2, %c0_3] : memref<2x16x8xf32, #tpu.memory_space<vmem>>, vector<1x16x8xf32>
    %3 = vector.shape_cast %2 : vector<1x16x8xf32> to vector<16x8xf32>
    %4 = tpu.concatenate %1, %3 in 0 : vector<16x8xf32>, vector<16x8xf32> -> vector<32x8xf32>
    %c0_4 = arith.constant 0 : index
    %c0_5 = arith.constant 0 : index
    %5 = vector.load %arg3[%c0_4, %c0_5] : memref<8x64xf32, #tpu.memory_space<vmem>>, vector<8x64xf32>
    %cst = arith.constant dense<0.000000e+00> : vector<32x64xf32>
    %6 = tpu.matmul %4, %5, %cst {dimension_numbers = #tpu.dot_dimension_numbers<[1], [0], [0], [1], [0, 0, 1, 1], [], []>} : vector<32x8xf32>, vector<8x64xf32>, vector<32x64xf32> -> vector<32x64xf32>
    %c0_6 = arith.constant 0 : index
    %c0_7 = arith.constant 0 : index
    %7 = vector.load %arg5[%c0_6, %c0_7] : memref<32x32xf32, #tpu.memory_space<vmem>>, vector<32x32xf32>
    %c0_8 = arith.constant 0 : index
    %c0_9 = arith.constant 0 : index
    %8 = vector.load %arg4[%c0_8, %c0_9] : memref<1x32xf32, #tpu.memory_space<vmem>>, vector<1x32xf32>
    %9 = vector.shape_cast %8 : vector<1x32xf32> to vector<1x32xf32>
    %10 = vector.broadcast %9 : vector<1x32xf32> to vector<16x32xf32>
    %11 = vector.extract_strided_slice %6 {offsets = [0, 0], sizes = [16, 64], strides = [1, 1]} : vector<32x64xf32> to vector<16x64xf32>
    %12 = vector.extract_strided_slice %11 {offsets = [0, 0], sizes = [16, 32], strides = [1, 1]} : vector<16x64xf32> to vector<16x32xf32>
    %13 = vector.extract_strided_slice %11 {offsets = [0, 32], sizes = [16, 32], strides = [1, 1]} : vector<16x64xf32> to vector<16x32xf32>
    %14 = tpu.concatenate %12, %13 in 0 : vector<16x32xf32>, vector<16x32xf32> -> vector<32x32xf32>
    %cst_10 = arith.constant dense<0.000000e+00> : vector<32x32xf32>
    %15 = tpu.matmul %7, %14, %cst_10 {dimension_numbers = #tpu.dot_dimension_numbers<[1], [0], [0], [1], [0, 0, 1, 1], [], []>} : vector<32x32xf32>, vector<32x32xf32>, vector<32x32xf32> -> vector<32x32xf32>
    %c0_11 = arith.constant 0 : index
    %c0_12 = arith.constant 0 : index
    %c0_13 = arith.constant 0 : index
    %16 = vector.load %arg1[%c0_11, %c0_12, %c0_13] : memref<2x16x32xf32, #tpu.memory_space<vmem>>, vector<1x16x32xf32>
    %17 = vector.shape_cast %16 : vector<1x16x32xf32> to vector<16x32xf32>
    %cst_14 = arith.constant dense<0.000000e+00> : vector<16x32xf32>
    %18 = tpu.matmul %17, %15, %cst_14 {dimension_numbers = #tpu.dot_dimension_numbers<[1], [0], [0], [1], [0, 0, 1, 1], [], []>} : vector<16x32xf32>, vector<32x32xf32>, vector<16x32xf32> -> vector<16x32xf32>
    %19 = arith.addf %18, %10 : vector<16x32xf32>
    %c0_15 = arith.constant 0 : index
    %c0_16 = arith.constant 0 : index
    %c0_17 = arith.constant 0 : index
    %20 = vector.load %arg6[%c0_15, %c0_16, %c0_17] : memref<2x16x32xf32, #tpu.memory_space<vmem>>, vector<1x16x32xf32>
    %21 = vector.shape_cast %20 : vector<1x16x32xf32> to vector<16x32xf32>
    %22 = vector.shape_cast %19 : vector<16x32xf32> to vector<1x16x32xf32>
    tpu.vector_store %arg6[%c0_15, %c0_16, %c0_17], %22 {strides = array<i32>} : memref<2x16x32xf32, #tpu.memory_space<vmem>>, vector<1x16x32xf32>,
    %23 = vector.extract_strided_slice %6 {offsets = [16, 0], sizes = [16, 64], strides = [1, 1]} : vector<32x64xf32> to vector<16x64xf32>
    %24 = vector.extract_strided_slice %23 {offsets = [0, 0], sizes = [16, 32], strides = [1, 1]} : vector<16x64xf32> to vector<16x32xf32>
    %25 = vector.extract_strided_slice %23 {offsets = [0, 32], sizes = [16, 32], strides = [1, 1]} : vector<16x64xf32> to vector<16x32xf32>
    %26 = tpu.concatenate %24, %25 in 0 : vector<16x32xf32>, vector<16x32xf32> -> vector<32x32xf32>
    %cst_18 = arith.constant dense<0.000000e+00> : vector<32x32xf32>
    %27 = tpu.matmul %7, %26, %cst_18 {dimension_numbers = #tpu.dot_dimension_numbers<[1], [0], [0], [1], [0, 0, 1, 1], [], []>} : vector<32x32xf32>, vector<32x32xf32>, vector<32x32xf32> -> vector<32x32xf32>
    %c1_19 = arith.constant 1 : index
    %c0_20 = arith.constant 0 : index
    %c0_21 = arith.constant 0 : index
    %28 = vector.load %arg1[%c1_19, %c0_20, %c0_21] : memref<2x16x32xf32, #tpu.memory_space<vmem>>, vector<1x16x32xf32>
    %29 = vector.shape_cast %28 : vector<1x16x32xf32> to vector<16x32xf32>
    %cst_22 = arith.constant dense<0.000000e+00> : vector<16x32xf32>
    %30 = tpu.matmul %29, %27, %cst_22 {dimension_numbers = #tpu.dot_dimension_numbers<[1], [0], [0], [1], [0, 0, 1, 1], [], []>} : vector<16x32xf32>, vector<32x32xf32>, vector<16x32xf32> -> vector<16x32xf32>
    %31 = arith.addf %30, %10 : vector<16x32xf32>
    %c1_23 = arith.constant 1 : index
    %c0_24 = arith.constant 0 : index
    %c0_25 = arith.constant 0 : index
    %32 = vector.load %arg6[%c1_23, %c0_24, %c0_25] : memref<2x16x32xf32, #tpu.memory_space<vmem>>, vector<1x16x32xf32>
    %33 = vector.shape_cast %32 : vector<1x16x32xf32> to vector<16x32xf32>
    %34 = vector.shape_cast %31 : vector<16x32xf32> to vector<1x16x32xf32>
    tpu.vector_store %arg6[%c1_23, %c0_24, %c0_25], %34 {strides = array<i32>} : memref<2x16x32xf32, #tpu.memory_space<vmem>>, vector<1x16x32xf32>,
    return
  }
  func.func @transform_0(%arg0: i32) -> (i32, i32, i32) {
    %c0_i32 = arith.constant 0 : i32
    %c0_i32_0 = arith.constant 0 : i32
    %c0_i32_1 = arith.constant 0 : i32
    return %arg0, %c0_i32, %c0_i32_0 : i32, i32, i32
  }
  func.func @transform_1(%arg0: i32) -> (i32, i32, i32) {
    %c0_i32 = arith.constant 0 : i32
    %c0_i32_0 = arith.constant 0 : i32
    %c0_i32_1 = arith.constant 0 : i32
    return %arg0, %c0_i32, %c0_i32_0 : i32, i32, i32
  }
  func.func @transform_2(%arg0: i32) -> (i32, i32) {
    %c0_i32 = arith.constant 0 : i32
    %c0_i32_0 = arith.constant 0 : i32
    %c0_i32_1 = arith.constant 0 : i32
    return %c0_i32, %c0_i32_0 : i32, i32
  }
  func.func @transform_3(%arg0: i32) -> (i32, i32) {
    %c0_i32 = arith.constant 0 : i32
    %c0_i32_0 = arith.constant 0 : i32
    %c0_i32_1 = arith.constant 0 : i32
    return %c0_i32, %c0_i32_0 : i32, i32
  }
  func.func @transform_4(%arg0: i32) -> (i32, i32) {
    %c0_i32 = arith.constant 0 : i32
    %c0_i32_0 = arith.constant 0 : i32
    %c0_i32_1 = arith.constant 0 : i32
    return %c0_i32, %c0_i32_0 : i32, i32
  }
  func.func @transform_5(%arg0: i32) -> (i32, i32, i32) {
    %c0_i32 = arith.constant 0 : i32
    %c0_i32_0 = arith.constant 0 : i32
    %c0_i32_1 = arith.constant 0 : i32
    return %arg0, %c0_i32, %c0_i32_0 : i32, i32, i32
  }
}

</mosaic_0001>

<llo_original>
// kernel: tpu_custom_call.1
$region0: #{tpu_custom_call.1}
  #allocation0 [shape = 'u32[]', space=smem, size = 0x4, offset = 0x4, fixed_abs, tag = 'smem constant byte address 0x4 - core index']
  #allocation1 [shape = 'u32[144,128]{1,0:T(1,128)}', space=vmem, size = 0x12000, scoped, tag = 'internal scratch']
  %s0 = inlined_call_operand.vmem [shape: f32[2,16,32], index: 0, kind: input, shape index: {}]
  %s1 = inlined_call_operand.vmem [shape: f32[2,16,8], index: 1, kind: input, shape index: {}]
  %s2 = inlined_call_operand.vmem [shape: f32[8,64], index: 2, kind: input, shape index: {}]
  %s3 = inlined_call_operand.vmem [shape: f32[1,32], index: 3, kind: input, shape index: {}]
  %s4 = inlined_call_operand.hbm [shape: f32[32,32], index: 4, kind: input, shape index: {}]
  %s5 = inlined_call_operand.hbm [shape: f32[2,16,32], index: 5, kind: output, shape index: {}]
  %s6 = sld [smem:[#allocation0]]
  $region34: #{tpu_custom_call.1} parent=0
    _
  %s8 = ssub.s32 1, %s6
  %s9 = scalar_select 0, %s8, %s6
  $region1: #{tpu_custom_call.1} parent=0
    #allocation2 [shape = 'u8[16384]{0}', space=vmem, size = 0x4000, scoped, tag = 'input window, operand 4, single buffered']
    #allocation3 [shape = 's32[1]{0}', space=sflag, size = 0x4, scoped, tag = 'scoped memory for tpu_custom_call.1']
    #allocation4 [shape = 's32[1]{0}', space=sflag, size = 0x4, scoped, tag = 'scoped memory for tpu_custom_call.1']
    #allocation5 [shape = 'u8[16384]{0}', space=vmem, size = 0x4000, scoped, tag = 'output window, operand 0, single buffered']
    %10 = vsyncpa [#allocation3], 0
    %11 = vsyncpa [#allocation4], 0
    // Predicated region
    $region2: #{tpu_custom_call.1} parent=1 // pred_check
      _
    $region3: #{tpu_custom_call.1} parent=1 // pred_check_branch
      %13 = sbr.rel (0) target = $region5
    $region4: #{tpu_custom_call.1} parent=1 // pred_region
      _
    $region5: #{tpu_custom_call.1} parent=1 // pred_fallthru
      _
    // Predicated region
    $region6: #{tpu_custom_call.1} parent=1 // pred_check
      _
    $region7: #{tpu_custom_call.1} parent=1 // pred_check_branch
      %15 = sbr.rel (0) target = $region9
    $region8: #{tpu_custom_call.1} parent=1 // pred_region
      _
    $region9: #{tpu_custom_call.1} parent=1 // pred_fallthru
      _
    // Predicated region
    $region10: #{tpu_custom_call.1} parent=1 // pred_check
      _
    $region11: #{tpu_custom_call.1} parent=1 // pred_check_branch
      %17 = sbr.rel (0) target = $region13
    $region12: #{tpu_custom_call.1} parent=1 // pred_region
      _
    $region13: #{tpu_custom_call.1} parent=1 // pred_fallthru
      _
    // Predicated region
    $region14: #{tpu_custom_call.1} parent=1 // pred_check
      _
    $region15: #{tpu_custom_call.1} parent=1 // pred_check_branch
      %19 = sbr.rel (0) target = $region17
    $region16: #{tpu_custom_call.1} parent=1 // pred_region
      _
    $region17: #{tpu_custom_call.1} parent=1 // pred_fallthru
      _
    // Predicated region
    $region18: #{tpu_custom_call.1} parent=1 // pred_check
      _
    $region19: #{tpu_custom_call.1} parent=1 // pred_check_branch
      %21 = sbr.rel (0) target = $region21
    $region20: #{tpu_custom_call.1} parent=1 // pred_region
      %s23 = ssub.s32 512, 512
      %24 = vsyncadd [#allocation3], %s23
      %s25 = sshll.u32 [#allocation2], 4
      %s26 = int_to_ptr.vmem [resolvable:$true] %s25
      %31 = dma.hbm_to_vmem [thread:$0]  %s4, 512, %s26, [#allocation3], 128, 128, 8
    $region21: #{tpu_custom_call.1} parent=1 // pred_fallthru
      _
    // Predicated region
    $region22: #{tpu_custom_call.1} parent=1 // pred_check
      _
    $region23: #{tpu_custom_call.1} parent=1 // pred_check_branch
      %33 = sbr.rel (0) target = $region25
    $region24: #{tpu_custom_call.1} parent=1 // pred_region
      %34 = dma.done [#allocation3], 512
    $region25: #{tpu_custom_call.1} parent=1 // pred_fallthru
      _
    %v35 = vld [vmem:[%s1] sm:$0xff]
    %v36 = vld [vmem:[%s1 + $0x8] sm:$0xff]
    %s37 = scalar_lea.vmem %s1, 16
    %v38 = vld [vmem:[%s37] sm:$0xff]
    %v39 = vld [vmem:[%s37 + $0x8] sm:$0xff]
    %v40 = vld [vmem:[%s2] sm:$0xff]
    %vm41 = vcmask 64512
    %v43 = vsel %vm41, %v35, 0
    %v46 = vsel %vm41, %v36, 0
    %v49 = vsel %vm41, %v38, 0
    %v52 = vsel %vm41, %v39, 0
    %54 = vmatprep.subr.mxu0 0.0
    %55 = vmatpush1.msra.mxu0 %v40
    %56 = vmatprep.subr.mxu0 0.0
    %57 = vmatpush1.msra.mxu0 0.0
    %58 = vmatprep.subr.mxu0 0.0
    %59 = vmatpush1.msra.mxu0 0.0
    %60 = vmatprep.subr.mxu0 0.0
    %61 = vmatpush1.msra.mxu0 0.0
    %62 = vmatprep.subr.mxu0 0.0
    %63 = vmatpush1.msra.mxu0 0.0
    %64 = vmatprep.subr.mxu0 0.0
    %65 = vmatpush1.msra.mxu0 0.0
    %66 = vmatprep.subr.mxu0 0.0
    %67 = vmatpush1.msra.mxu0 0.0
    %68 = vmatprep.subr.mxu0 0.0
    %69 = vmatpush1.msra.mxu0 0.0
    %70 = vmatprep.subr.mxu0 0.0
    %71 = vmatpush1.msra.mxu0 0.0
    %72 = vmatprep.subr.mxu0 0.0
    %73 = vmatpush1.msra.mxu0 0.0
    %74 = vmatprep.subr.mxu0 0.0
    %75 = vmatpush1.msra.mxu0 0.0
    %76 = vmatprep.subr.mxu0 0.0
    %77 = vmatpush1.msra.mxu0 0.0
    %78 = vmatprep.subr.mxu0 0.0
    %79 = vmatpush1.msra.mxu0 0.0
    %80 = vmatprep.subr.mxu0 0.0
    %81 = vmatpush1.msra.mxu0 0.0
    %82 = vmatprep.subr.mxu0 0.0
    %83 = vmatpush1.msra.mxu0 0.0
    %84 = vmatprep.subr.mxu0 0.0
    %85 = vmatpush1.msra.mxu0 0.0
    %86 = vmatprep.subr.mxu0 0.0
    %87 = vmatpush1.msra.mxu0 0.0
    %88 = vmatprep.subr.mxu0 0.0
    %89 = vmatpush1.msra.mxu0 0.0
    %90 = vmatprep.subr.mxu0 0.0
    %91 = vmatpush1.msra.mxu0 0.0
    %92 = vmatprep.subr.mxu0 0.0
    %93 = vmatpush1.msra.mxu0 0.0
    %94 = vmatprep.subr.mxu0 0.0
    %95 = vmatpush1.msra.mxu0 0.0
    %96 = vmatprep.subr.mxu0 0.0
    %97 = vmatpush1.msra.mxu0 0.0
    %98 = vmatprep.subr.mxu0 0.0
    %99 = vmatpush1.msra.mxu0 0.0
    %100 = vmatprep.subr.mxu0 0.0
    %101 = vmatpush1.msra.mxu0 0.0
    %102 = vmatprep.subr.mxu0 0.0
    %103 = vmatpush1.msra.mxu0 0.0
    %104 = vmatprep.subr.mxu0 0.0
    %105 = vmatpush1.msra.mxu0 0.0
    %106 = vmatprep.subr.mxu0 0.0
    %107 = vmatpush1.msra.mxu0 0.0
    %108 = vmatprep.subr.mxu0 0.0
    %109 = vmatpush1.msra.mxu0 0.0
    %110 = vmatprep.subr.mxu0 0.0
    %111 = vmatpush1.msra.mxu0 0.0
    %112 = vmatprep.subr.mxu0 0.0
    %113 = vmatpush1.msra.mxu0 0.0
    %114 = vmatprep.subr.mxu0 0.0
    %115 = vmatpush1.msra.mxu0 0.0
    %116 = vmatprep.subr.mxu0 0.0
    %117 = vmatpush1.msra.mxu0 0.0
    %118 = vmatprep.mubr.f32.mxu0 0.0
    %119 = vmatmul.mubr.f32.gmra.mrb[0].mxu0 %v43
    %v120 = vpop.f32.mrb[0].mxu0
    %v121 = vadd.f32 0.0, %v120
    %v122 = vpop.f32.mrb[0].mxu0
    %123 = vmatprep.mubr.f32.mxu0 0.0
    %124 = vmatmul.mubr.f32.gmra.mrb[0].mxu0 %v46
    %v125 = vpop.f32.mrb[0].mxu0
    %v126 = vadd.f32 0.0, %v125
    %v127 = vpop.f32.mrb[0].mxu0
    %128 = vmatprep.mubr.f32.mxu0 0.0
    %129 = vmatmul.mubr.f32.gmra.mrb[0].mxu0 %v49
    %v130 = vpop.f32.mrb[0].mxu0
    %v131 = vadd.f32 0.0, %v130
    %v132 = vpop.f32.mrb[0].mxu0
    %133 = vmatprep.mubr.f32.mxu0 0.0
    %134 = vmatmul.mubr.f32.gmra.mrb[0].mxu0 %v52
    %v135 = vpop.f32.mrb[0].mxu0
    %v136 = vadd.f32 0.0, %v135
    %v137 = vpop.f32.mrb[0].mxu0
    %138 = vdwg.mxu0
    %v139 = vld [vmem:[#allocation2] sm:$0xff]
    %v140 = vld [vmem:[#allocation2 + $0x8] sm:$0xff]
    %v141 = vld [vmem:[#allocation2 + $0x10] sm:$0xff]
    %v142 = vld [vmem:[#allocation2 + $0x18] sm:$0xff]
    %v143 = vld [vmem:[%s3] sm:$0x1]
    %v145 = vlaneseq
    %v146 = vshrl.u32 %v145, 7
    %v147 = vsub.s32 0, %v146
    %v148 = vrot.slane %v143, %v147
    %152 = vrot.lane.b32.xlu0 %v121, 96
    %v153 = vpop.permute.xlu0 %152
    %154 = vrot.lane.b32.xlu0 %v126, 96
    %v155 = vpop.permute.xlu0 %154
    %vm158 = vcmask 261120
    %v160 = vsel %vm158, %v139, 0
    %v163 = vsel %vm158, %v140, 0
    %v166 = vsel %vm158, %v141, 0
    %v169 = vsel %vm158, %v142, 0
    %171 = vmatprep.subr.mxu0 0.0
    %172 = vmatpush1.msra.mxu0 %v121
    %173 = vmatprep.subr.mxu0 0.0
    %174 = vmatpush1.msra.mxu0 %v126
    %175 = vmatprep.subr.mxu0 0.0
    %176 = vmatpush1.msra.mxu0 %v153
    %177 = vmatprep.subr.mxu0 0.0
    %178 = vmatpush1.msra.mxu0 %v155
    %179 = vmatprep.subr.mxu0 0.0
    %180 = vmatpush1.msra.mxu0 0.0
    %181 = vmatprep.subr.mxu0 0.0
    %182 = vmatpush1.msra.mxu0 0.0
    %183 = vmatprep.subr.mxu0 0.0
    %184 = vmatpush1.msra.mxu0 0.0
    %185 = vmatprep.subr.mxu0 0.0
    %186 = vmatpush1.msra.mxu0 0.0
    %187 = vmatprep.subr.mxu0 0.0
    %188 = vmatpush1.msra.mxu0 0.0
    %189 = vmatprep.subr.mxu0 0.0
    %190 = vmatpush1.msra.mxu0 0.0
    %191 = vmatprep.subr.mxu0 0.0
    %192 = vmatpush1.msra.mxu0 0.0
    %193 = vmatprep.subr.mxu0 0.0
    %194 = vmatpush1.msra.mxu0 0.0
    %195 = vmatprep.subr.mxu0 0.0
    %196 = vmatpush1.msra.mxu0 0.0
    %197 = vmatprep.subr.mxu0 0.0
    %198 = vmatpush1.msra.mxu0 0.0
    %199 = vmatprep.subr.mxu0 0.0
    %200 = vmatpush1.msra.mxu0 0.0
    %201 = vmatprep.subr.mxu0 0.0
    %202 = vmatpush1.msra.mxu0 0.0
    %203 = vmatprep.subr.mxu0 0.0
    %204 = vmatpush1.msra.mxu0 0.0
    %205 = vmatprep.subr.mxu0 0.0
    %206 = vmatpush1.msra.mxu0 0.0
    %207 = vmatprep.subr.mxu0 0.0
    %208 = vmatpush1.msra.mxu0 0.0
    %209 = vmatprep.subr.mxu0 0.0
    %210 = vmatpush1.msra.mxu0 0.0
    %211 = vmatprep.subr.mxu0 0.0
    %212 = vmatpush1.msra.mxu0 0.0
    %213 = vmatprep.subr.mxu0 0.0
    %214 = vmatpush1.msra.mxu0 0.0
    %215 = vmatprep.subr.mxu0 0.0
    %216 = vmatpush1.msra.mxu0 0.0
    %217 = vmatprep.subr.mxu0 0.0
    %218 = vmatpush1.msra.mxu0 0.0
    %219 = vmatprep.subr.mxu0 0.0
    %220 = vmatpush1.msra.mxu0 0.0
    %221 = vmatprep.subr.mxu0 0.0
    %222 = vmatpush1.msra.mxu0 0.0
    %223 = vmatprep.subr.mxu0 0.0
    %224 = vmatpush1.msra.mxu0 0.0
    %225 = vmatprep.subr.mxu0 0.0
    %226 = vmatpush1.msra.mxu0 0.0
    %227 = vmatprep.subr.mxu0 0.0
    %228 = vmatpush1.msra.mxu0 0.0
    %229 = vmatprep.subr.mxu0 0.0
    %230 = vmatpush1.msra.mxu0 0.0
    %231 = vmatprep.subr.mxu0 0.0
    %232 = vmatpush1.msra.mxu0 0.0
    %233 = vmatprep.subr.mxu0 0.0
    %234 = vmatpush1.msra.mxu0 0.0
    %235 = vmatprep.mubr.f32.mxu0 0.0
    %236 = vmatmul.mubr.f32.gmra.mrb[0].mxu0 %v160
    %v237 = vpop.f32.mrb[0].mxu0
    %v238 = vadd.f32 0.0, %v237
    %v239 = vpop.f32.mrb[0].mxu0
    %240 = vmatprep.mubr.f32.mxu0 0.0
    %241 = vmatmul.mubr.f32.gmra.mrb[0].mxu0 %v163
    %v242 = vpop.f32.mrb[0].mxu0
    %v243 = vadd.f32 0.0, %v242
    %v244 = vpop.f32.mrb[0].mxu0
    %245 = vmatprep.mubr.f32.mxu0 0.0
    %246 = vmatmul.mubr.f32.gmra.mrb[0].mxu0 %v166
    %v247 = vpop.f32.mrb[0].mxu0
    %v248 = vadd.f32 0.0, %v247
    %v249 = vpop.f32.mrb[0].mxu0
    %250 = vmatprep.mubr.f32.mxu0 0.0
    %251 = vmatmul.mubr.f32.gmra.mrb[0].mxu0 %v169
    %v252 = vpop.f32.mrb[0].mxu0
    %v253 = vadd.f32 0.0, %v252
    %v254 = vpop.f32.mrb[0].mxu0
    %255 = vdwg.mxu0
    %v256 = vld [vmem:[%s0] sm:$0xff]
    %v257 = vld [vmem:[%s0 + $0x8] sm:$0xff]
    %v259 = vsel %vm158, %v256, 0
    %v262 = vsel %vm158, %v257, 0
    %264 = vmatprep.subr.mxu0 0.0
    %265 = vmatpush1.msra.mxu0 %v238
    %266 = vmatprep.subr.mxu0 0.0
    %267 = vmatpush1.msra.mxu0 %v243
    %268 = vmatprep.subr.mxu0 0.0
    %269 = vmatpush1.msra.mxu0 %v248
    %270 = vmatprep.subr.mxu0 0.0
    %271 = vmatpush1.msra.mxu0 %v253
    %272 = vmatprep.subr.mxu0 0.0
    %273 = vmatpush1.msra.mxu0 0.0
    %274 = vmatprep.subr.mxu0 0.0
    %275 = vmatpush1.msra.mxu0 0.0
    %276 = vmatprep.subr.mxu0 0.0
    %277 = vmatpush1.msra.mxu0 0.0
    %278 = vmatprep.subr.mxu0 0.0
    %279 = vmatpush1.msra.mxu0 0.0
    %280 = vmatprep.subr.mxu0 0.0
    %281 = vmatpush1.msra.mxu0 0.0
    %282 = vmatprep.subr.mxu0 0.0
    %283 = vmatpush1.msra.mxu0 0.0
    %284 = vmatprep.subr.mxu0 0.0
    %285 = vmatpush1.msra.mxu0 0.0
    %286 = vmatprep.subr.mxu0 0.0
    %287 = vmatpush1.msra.mxu0 0.0
    %288 = vmatprep.subr.mxu0 0.0
    %289 = vmatpush1.msra.mxu0 0.0
    %290 = vmatprep.subr.mxu0 0.0
    %291 = vmatpush1.msra.mxu0 0.0
    %292 = vmatprep.subr.mxu0 0.0
    %293 = vmatpush1.msra.mxu0 0.0
    %294 = vmatprep.subr.mxu0 0.0
    %295 = vmatpush1.msra.mxu0 0.0
    %296 = vmatprep.subr.mxu0 0.0
    %297 = vmatpush1.msra.mxu0 0.0
    %298 = vmatprep.subr.mxu0 0.0
    %299 = vmatpush1.msra.mxu0 0.0
    %300 = vmatprep.subr.mxu0 0.0
    %301 = vmatpush1.msra.mxu0 0.0
    %302 = vmatprep.subr.mxu0 0.0
    %303 = vmatpush1.msra.mxu0 0.0
    %304 = vmatprep.subr.mxu0 0.0
    %305 = vmatpush1.msra.mxu0 0.0
    %306 = vmatprep.subr.mxu0 0.0
    %307 = vmatpush1.msra.mxu0 0.0
    %308 = vmatprep.subr.mxu0 0.0
    %309 = vmatpush1.msra.mxu0 0.0
    %310 = vmatprep.subr.mxu0 0.0
    %311 = vmatpush1.msra.mxu0 0.0
    %312 = vmatprep.subr.mxu0 0.0
    %313 = vmatpush1.msra.mxu0 0.0
    %314 = vmatprep.subr.mxu0 0.0
    %315 = vmatpush1.msra.mxu0 0.0
    %316 = vmatprep.subr.mxu0 0.0
    %317 = vmatpush1.msra.mxu0 0.0
    %318 = vmatprep.subr.mxu0 0.0
    %319 = vmatpush1.msra.mxu0 0.0
    %320 = vmatprep.subr.mxu0 0.0
    %321 = vmatpush1.msra.mxu0 0.0
    %322 = vmatprep.subr.mxu0 0.0
    %323 = vmatpush1.msra.mxu0 0.0
    %324 = vmatprep.subr.mxu0 0.0
    %325 = vmatpush1.msra.mxu0 0.0
    %326 = vmatprep.subr.mxu0 0.0
    %327 = vmatpush1.msra.mxu0 0.0
    %328 = vmatprep.mubr.f32.mxu0 0.0
    %329 = vmatmul.mubr.f32.gmra.mrb[0].mxu0 %v259
    %v330 = vpop.f32.mrb[0].mxu0
    %v331 = vadd.f32 %v148, %v330
    %v332 = vpop.f32.mrb[0].mxu0
    %333 = vmatprep.mubr.f32.mxu0 0.0
    %334 = vmatmul.mubr.f32.gmra.mrb[0].mxu0 %v262
    %v335 = vpop.f32.mrb[0].mxu0
    %v336 = vadd.f32 %v148, %v335
    %v337 = vpop.f32.mrb[0].mxu0
    %338 = vdwg.mxu0
    %339 = vst.msk [vmem:[#allocation5] sm:$0xff] %vm158, %v331
    %340 = vst.msk [vmem:[#allocation5 + $0x8] sm:$0xff] %vm158, %v336
    %343 = vrot.lane.b32.xlu0 %v131, 96
    %v344 = vpop.permute.xlu0 %343
    %345 = vrot.lane.b32.xlu0 %v136, 96
    %v346 = vpop.permute.xlu0 %345
    %349 = vmatprep.subr.mxu0 0.0
    %350 = vmatpush1.msra.mxu0 %v131
    %351 = vmatprep.subr.mxu0 0.0
    %352 = vmatpush1.msra.mxu0 %v136
    %353 = vmatprep.subr.mxu0 0.0
    %354 = vmatpush1.msra.mxu0 %v344
    %355 = vmatprep.subr.mxu0 0.0
    %356 = vmatpush1.msra.mxu0 %v346
    %357 = vmatprep.subr.mxu0 0.0
    %358 = vmatpush1.msra.mxu0 0.0
    %359 = vmatprep.subr.mxu0 0.0
    %360 = vmatpush1.msra.mxu0 0.0
    %361 = vmatprep.subr.mxu0 0.0
    %362 = vmatpush1.msra.mxu0 0.0
    %363 = vmatprep.subr.mxu0 0.0
    %364 = vmatpush1.msra.mxu0 0.0
    %365 = vmatprep.subr.mxu0 0.0
    %366 = vmatpush1.msra.mxu0 0.0
    %367 = vmatprep.subr.mxu0 0.0
    %368 = vmatpush1.msra.mxu0 0.0
    %369 = vmatprep.subr.mxu0 0.0
    %370 = vmatpush1.msra.mxu0 0.0
    %371 = vmatprep.subr.mxu0 0.0
    %372 = vmatpush1.msra.mxu0 0.0
    %373 = vmatprep.subr.mxu0 0.0
    %374 = vmatpush1.msra.mxu0 0.0
    %375 = vmatprep.subr.mxu0 0.0
    %376 = vmatpush1.msra.mxu0 0.0
    %377 = vmatprep.subr.mxu0 0.0
    %378 = vmatpush1.msra.mxu0 0.0
    %379 = vmatprep.subr.mxu0 0.0
    %380 = vmatpush1.msra.mxu0 0.0
    %381 = vmatprep.subr.mxu0 0.0
    %382 = vmatpush1.msra.mxu0 0.0
    %383 = vmatprep.subr.mxu0 0.0
    %384 = vmatpush1.msra.mxu0 0.0
    %385 = vmatprep.subr.mxu0 0.0
    %386 = vmatpush1.msra.mxu0 0.0
    %387 = vmatprep.subr.mxu0 0.0
    %388 = vmatpush1.msra.mxu0 0.0
    %389 = vmatprep.subr.mxu0 0.0
    %390 = vmatpush1.msra.mxu0 0.0
    %391 = vmatprep.subr.mxu0 0.0
    %392 = vmatpush1.msra.mxu0 0.0
    %393 = vmatprep.subr.mxu0 0.0
    %394 = vmatpush1.msra.mxu0 0.0
    %395 = vmatprep.subr.mxu0 0.0
    %396 = vmatpush1.msra.mxu0 0.0
    %397 = vmatprep.subr.mxu0 0.0
    %398 = vmatpush1.msra.mxu0 0.0
    %399 = vmatprep.subr.mxu0 0.0
    %400 = vmatpush1.msra.mxu0 0.0
    %401 = vmatprep.subr.mxu0 0.0
    %402 = vmatpush1.msra.mxu0 0.0
    %403 = vmatprep.subr.mxu0 0.0
    %404 = vmatpush1.msra.mxu0 0.0
    %405 = vmatprep.subr.mxu0 0.0
    %406 = vmatpush1.msra.mxu0 0.0
    %407 = vmatprep.subr.mxu0 0.0
    %408 = vmatpush1.msra.mxu0 0.0
    %409 = vmatprep.subr.mxu0 0.0
    %410 = vmatpush1.msra.mxu0 0.0
    %411 = vmatprep.subr.mxu0 0.0
    %412 = vmatpush1.msra.mxu0 0.0
    %413 = vmatprep.mubr.f32.mxu0 0.0
    %414 = vmatmul.mubr.f32.gmra.mrb[0].mxu0 %v160
    %v415 = vpop.f32.mrb[0].mxu0
    %v416 = vadd.f32 0.0, %v415
    %v417 = vpop.f32.mrb[0].mxu0
    %418 = vmatprep.mubr.f32.mxu0 0.0
    %419 = vmatmul.mubr.f32.gmra.mrb[0].mxu0 %v163
    %v420 = vpop.f32.mrb[0].mxu0
    %v421 = vadd.f32 0.0, %v420
    %v422 = vpop.f32.mrb[0].mxu0
    %423 = vmatprep.mubr.f32.mxu0 0.0
    %424 = vmatmul.mubr.f32.gmra.mrb[0].mxu0 %v166
    %v425 = vpop.f32.mrb[0].mxu0
    %v426 = vadd.f32 0.0, %v425
    %v427 = vpop.f32.mrb[0].mxu0
    %428 = vmatprep.mubr.f32.mxu0 0.0
    %429 = vmatmul.mubr.f32.gmra.mrb[0].mxu0 %v169
    %v430 = vpop.f32.mrb[0].mxu0
    %v431 = vadd.f32 0.0, %v430
    %v432 = vpop.f32.mrb[0].mxu0
    %433 = vdwg.mxu0
    %s434 = scalar_lea.vmem %s0, 16
    %v435 = vld [vmem:[%s434] sm:$0xff]
    %v436 = vld [vmem:[%s434 + $0x8] sm:$0xff]
    %v438 = vsel %vm158, %v435, 0
    %v441 = vsel %vm158, %v436, 0
    %443 = vmatprep.subr.mxu0 0.0
    %444 = vmatpush1.msra.mxu0 %v416
    %445 = vmatprep.subr.mxu0 0.0
    %446 = vmatpush1.msra.mxu0 %v421
    %447 = vmatprep.subr.mxu0 0.0
    %448 = vmatpush1.msra.mxu0 %v426
    %449 = vmatprep.subr.mxu0 0.0
    %450 = vmatpush1.msra.mxu0 %v431
    %451 = vmatprep.subr.mxu0 0.0
    %452 = vmatpush1.msra.mxu0 0.0
    %453 = vmatprep.subr.mxu0 0.0
    %454 = vmatpush1.msra.mxu0 0.0
    %455 = vmatprep.subr.mxu0 0.0
    %456 = vmatpush1.msra.mxu0 0.0
    %457 = vmatprep.subr.mxu0 0.0
    %458 = vmatpush1.msra.mxu0 0.0
    %459 = vmatprep.subr.mxu0 0.0
    %460 = vmatpush1.msra.mxu0 0.0
    %461 = vmatprep.subr.mxu0 0.0
    %462 = vmatpush1.msra.mxu0 0.0
    %463 = vmatprep.subr.mxu0 0.0
    %464 = vmatpush1.msra.mxu0 0.0
    %465 = vmatprep.subr.mxu0 0.0
    %466 = vmatpush1.msra.mxu0 0.0
    %467 = vmatprep.subr.mxu0 0.0
    %468 = vmatpush1.msra.mxu0 0.0
    %469 = vmatprep.subr.mxu0 0.0
    %470 = vmatpush1.msra.mxu0 0.0
    %471 = vmatprep.subr.mxu0 0.0
    %472 = vmatpush1.msra.mxu0 0.0
    %473 = vmatprep.subr.mxu0 0.0
    %474 = vmatpush1.msra.mxu0 0.0
    %475 = vmatprep.subr.mxu0 0.0
    %476 = vmatpush1.msra.mxu0 0.0
    %477 = vmatprep.subr.mxu0 0.0
    %478 = vmatpush1.msra.mxu0 0.0
    %479 = vmatprep.subr.mxu0 0.0
    %480 = vmatpush1.msra.mxu0 0.0
    %481 = vmatprep.subr.mxu0 0.0
    %482 = vmatpush1.msra.mxu0 0.0
    %483 = vmatprep.subr.mxu0 0.0
    %484 = vmatpush1.msra.mxu0 0.0
    %485 = vmatprep.subr.mxu0 0.0
    %486 = vmatpush1.msra.mxu0 0.0
    %487 = vmatprep.subr.mxu0 0.0
    %488 = vmatpush1.msra.mxu0 0.0
    %489 = vmatprep.subr.mxu0 0.0
    %490 = vmatpush1.msra.mxu0 0.0
    %491 = vmatprep.subr.mxu0 0.0
    %492 = vmatpush1.msra.mxu0 0.0
    %493 = vmatprep.subr.mxu0 0.0
    %494 = vmatpush1.msra.mxu0 0.0
    %495 = vmatprep.subr.mxu0 0.0
    %496 = vmatpush1.msra.mxu0 0.0
    %497 = vmatprep.subr.mxu0 0.0
    %498 = vmatpush1.msra.mxu0 0.0
    %499 = vmatprep.subr.mxu0 0.0
    %500 = vmatpush1.msra.mxu0 0.0
    %501 = vmatprep.subr.mxu0 0.0
    %502 = vmatpush1.msra.mxu0 0.0
    %503 = vmatprep.subr.mxu0 0.0
    %504 = vmatpush1.msra.mxu0 0.0
    %505 = vmatprep.subr.mxu0 0.0
    %506 = vmatpush1.msra.mxu0 0.0
    %507 = vmatprep.mubr.f32.mxu0 0.0
    %508 = vmatmul.mubr.f32.gmra.mrb[0].mxu0 %v438
    %v509 = vpop.f32.mrb[0].mxu0
    %v510 = vadd.f32 %v148, %v509
    %v511 = vpop.f32.mrb[0].mxu0
    %512 = vmatprep.mubr.f32.mxu0 0.0
    %513 = vmatmul.mubr.f32.gmra.mrb[0].mxu0 %v441
    %v514 = vpop.f32.mrb[0].mxu0
    %v515 = vadd.f32 %v148, %v514
    %v516 = vpop.f32.mrb[0].mxu0
    %517 = vdwg.mxu0
    %s518 = scalar_lea.vmem [#allocation5], 16
    %519 = vst.msk [vmem:[%s518] sm:$0xff] %vm158, %v510
    %520 = vst.msk [vmem:[%s518 + $0x8] sm:$0xff] %vm158, %v515
    // Predicated region
    $region26: #{tpu_custom_call.1} parent=1 // pred_check
      _
    $region27: #{tpu_custom_call.1} parent=1 // pred_check_branch
      %522 = sbr.rel (0) target = $region29
    $region28: #{tpu_custom_call.1} parent=1 // pred_region
      %s524 = ssub.s32 512, 512
      %525 = vsyncadd [#allocation4], %s524
      %s526 = sshll.u32 [#allocation5], 4
      %s527 = int_to_ptr.vmem [resolvable:$true] %s526
      %532 = dma.vmem_to_hbm [thread:$0]  %s527, 512, %s5, [#allocation4], 128, 128, 8
    $region29: #{tpu_custom_call.1} parent=1 // pred_fallthru
      _
    // Predicated region
    $region30: #{tpu_custom_call.1} parent=1 // pred_check
      _
    $region31: #{tpu_custom_call.1} parent=1 // pred_check_branch
      %534 = sbr.rel (0) target = $region33
    $region32: #{tpu_custom_call.1} parent=1 // pred_region
      %535 = dma.done [#allocation4], 512
    $region33: #{tpu_custom_call.1} parent=1 // pred_fallthru
      _
    %536 = vsyncpa [#allocation3], 1
    %537 = vsyncpa [#allocation4], 1

</llo_original>
